<compile_context>
chip_gen: v7x
topology: tpu7x:2x2x1
jax: 0.10.0
libtpu: 0.0.40
codegen_flags: <defaults>
</compile_context>

<pallas_src>
import jax
import jax.numpy as jnp
from jax.experimental import pallas as pl
from jax.experimental.pallas import tpu as pltpu

LANE = 128          # TPU lane width
MAX_TILE_B = 2048   # batch tile (lanes) — a few hundred KB of VMEM per buffer


def energynet_kernel(x_ref, w1_ref, b1_ref, w2_ref, b2_ref, w3_ref, b3_ref, o_ref):
    # Transposed layout: features on sublanes, batch on lanes.
    x = x_ref[...]             # [2, TB]
    w1 = w1_ref[...]           # [16, 2]

    # fc1 (K=2): two broadcast mul-adds on the VPU (skip the MXU entirely).
    h1 = w1[:, 0:1] * x[0:1, :] + w1[:, 1:2] * x[1:2, :] + b1_ref[...]
    h1 = jnp.maximum(h1, 0.0)                                  # [16, TB]

    # fc2 (8 x 16): keep on the MXU with f32 accumulation.
    h2 = jnp.dot(w2_ref[...], h1, preferred_element_type=jnp.float32) + b2_ref[...]
    h2 = jnp.maximum(h2, 0.0)                                  # [8, TB]

    # fc3 (K=8 -> 1): weighted sum + sublane reduce (VPU/XLU), no MXU.
    out = jnp.sum(w3_ref[...] * h2, axis=0, keepdims=True) + b3_ref[...]
    o_ref[...] = out.astype(o_ref.dtype)                       # [1, TB]


def energynet_forward(x, params):
    """x: [batch, 2] float32. params in PyTorch layout: w [out, in], b [out]."""
    w1, b1 = params["w1"], params["b1"]   # [16, 2], [16]
    w2, b2 = params["w2"], params["b2"]   # [8, 16], [8]
    w3, b3 = params["w3"], params["b3"]   # [1, 8],  [1]

    batch = x.shape[0]
    d_in, d_h1, d_h2, d_out = w1.shape[1], w1.shape[0], w2.shape[0], w3.shape[0]

    # Batch-on-lanes layout, padded to a lane-aligned batch tile.
    tile_b = min(MAX_TILE_B, -(-batch // LANE) * LANE)
    padded = -(-batch // tile_b) * tile_b
    x_t = x.T                                                 # [2, batch]
    if padded != batch:
        x_t = jnp.pad(x_t, ((0, 0), (0, padded - batch)))

    # Column-vector biases / fc3 weight so they broadcast along lanes (batch).
    b1c = b1.reshape(d_h1, 1)
    b2c = b2.reshape(d_h2, 1)
    w3c = w3.reshape(d_h2, 1)
    b3c = b3.reshape(d_out, 1)

    grid = (padded // tile_b,)
    const = lambda shape: pl.BlockSpec(shape, lambda i: (0, 0))

    n_param = w1.size + b1.size + w2.size + b2.size + w3.size + b3.size
    cost = pl.CostEstimate(
        flops=2 * padded * (d_in * d_h1 + d_h1 * d_h2 + d_h2 * d_out),
        transcendentals=0,
        bytes_accessed=4 * padded * (d_in + d_out) + 4 * n_param,
    )

    out_t = pl.pallas_call(
        energynet_kernel,
        out_shape=jax.ShapeDtypeStruct((d_out, padded), jnp.float32),
        grid=grid,
        in_specs=[
            pl.BlockSpec((d_in, tile_b), lambda i: (0, i)),   # x tile streams over batch
            const((d_h1, d_in)),                              # weights/biases resident
            const((d_h1, 1)),
            const((d_h2, d_h1)),
            const((d_h2, 1)),
            const((d_h2, 1)),
            const((d_out, 1)),
        ],
        out_specs=pl.BlockSpec((d_out, tile_b), lambda i: (0, i)),
        compiler_params=pltpu.CompilerParams(
            dimension_semantics=("parallel",),   # megacore sharding on v7x, no-op on v5e/v6e
            vmem_limit_bytes=32 * 1024 * 1024,   # safe on v7x's 64 MiB physical VMEM
        ),
        cost_estimate=cost,
    )(x_t, w1, b1c, w2, b2c, w3c, b3c)

    return out_t[:, :batch].T                                 # [batch, 1]


def init_params(key):
    """Deterministic init mimicking nn.Linear (PyTorch layout: w [out,in], b [out])."""
    k1, k2, k3, k4, k5, k6 = jax.random.split(key, 6)

    def lin(kw, kb, fan_in, fan_out):
        bound = 1.0 / jnp.sqrt(jnp.float32(fan_in))
        w = jax.random.uniform(kw, (fan_out, fan_in), jnp.float32, -bound, bound)
        b = jax.random.uniform(kb, (fan_out,), jnp.float32, -bound, bound)
        return w, b

    w1, b1 = lin(k1, k2, 2, 16)
    w2, b2 = lin(k3, k4, 16, 8)
    w3, b3 = lin(k5, k6, 8, 1)
    return {"w1": w1, "b1": b1, "w2": w2, "b2": b2, "w3": w3, "b3": b3}


def energynet_ref(x, p):
    h1 = jnp.maximum(x @ p["w1"].T + p["b1"], 0.0)
    h2 = jnp.maximum(h1 @ p["w2"].T + p["b2"], 0.0)
    return h2 @ p["w3"].T + p["b3"]


if __name__ == "__main__":
    key = jax.random.PRNGKey(0)
    kx, kp = jax.random.split(key)
    params = init_params(kp)

    # Small demo batch (not lane-aligned -> exercises the padding path).
    batch = 8
    x = jax.random.normal(kx, (batch, 2), jnp.float32)

    out = energynet_forward(x, params)
    out = jax.block_until_ready(out)
    ref = energynet_ref(x, params)
    assert out.shape == (batch, 1)
    assert jnp.allclose(out, ref, atol=1e-5, rtol=1e-5)

    # Second shape to check padding/slicing on a non-multiple-of-128 batch.
    x2 = jax.random.normal(kx, (300, 2), jnp.float32)
    out2 = jax.block_until_ready(energynet_forward(x2, params))
    assert out2.shape == (300, 1)
    assert jnp.allclose(out2, energynet_ref(x2, params), atol=1e-5, rtol=1e-5)

    print("KERNEL_OK")
</pallas_src>

<mosaic_0001>
module attributes {stable_mosaic.version = 11 : i64} {
  func.func @energynet_kernel(%arg0: i32, %arg1: memref<2x128xf32, #tpu.memory_space<vmem>>, %arg2: memref<16x2xf32, #tpu.memory_space<vmem>>, %arg3: memref<16x1xf32, #tpu.memory_space<vmem>>, %arg4: memref<8x16xf32, #tpu.memory_space<vmem>>, %arg5: memref<8x1xf32, #tpu.memory_space<vmem>>, %arg6: memref<8x1xf32, #tpu.memory_space<vmem>>, %arg7: memref<1x1xf32, #tpu.memory_space<vmem>>, %arg8: memref<1x128xf32, #tpu.memory_space<vmem>>) attributes {dimension_semantics = [#tpu.dimension_semantics<parallel>], iteration_bounds = array<i64: 1>, scalar_prefetch = 0 : i64, scratch_operands = 0 : i64, tpu.core_type = #tpu.core_type<tc>, window_params = [{transform_indices = @transform_0, window_bounds = array<i64: 2, 128>}, {pipeline_mode = #tpu.pipeline_mode<synchronous>, transform_indices = @transform_1, window_bounds = array<i64: 16, 2>}, {pipeline_mode = #tpu.pipeline_mode<synchronous>, transform_indices = @transform_2, window_bounds = array<i64: 16, 1>}, {pipeline_mode = #tpu.pipeline_mode<synchronous>, transform_indices = @transform_3, window_bounds = array<i64: 8, 16>}, {pipeline_mode = #tpu.pipeline_mode<synchronous>, transform_indices = @transform_4, window_bounds = array<i64: 8, 1>}, {pipeline_mode = #tpu.pipeline_mode<synchronous>, transform_indices = @transform_5, window_bounds = array<i64: 8, 1>}, {pipeline_mode = #tpu.pipeline_mode<synchronous>, transform_indices = @transform_6, window_bounds = array<i64: 1, 1>}, {transform_indices = @transform_7, window_bounds = array<i64: 1, 128>}]} {
    %c0 = arith.constant 0 : index
    %c0_0 = arith.constant 0 : index
    %0 = vector.load %arg1[%c0, %c0_0] : memref<2x128xf32, #tpu.memory_space<vmem>>, vector<2x128xf32>
    %c0_1 = arith.constant 0 : index
    %c0_2 = arith.constant 0 : index
    %1 = vector.load %arg2[%c0_1, %c0_2] : memref<16x2xf32, #tpu.memory_space<vmem>>, vector<16x2xf32>
    %2 = vector.extract_strided_slice %1 {offsets = [0, 0], sizes = [16, 1], strides = [1, 1]} : vector<16x2xf32> to vector<16x1xf32>
    %3 = vector.extract_strided_slice %0 {offsets = [0, 0], sizes = [1, 128], strides = [1, 1]} : vector<2x128xf32> to vector<1x128xf32>
    %4 = vector.broadcast %2 : vector<16x1xf32> to vector<16x128xf32>
    %5 = vector.broadcast %3 : vector<1x128xf32> to vector<16x128xf32>
    %6 = arith.mulf %4, %5 : vector<16x128xf32>
    %7 = vector.extract_strided_slice %1 {offsets = [0, 1], sizes = [16, 1], strides = [1, 1]} : vector<16x2xf32> to vector<16x1xf32>
    %8 = vector.extract_strided_slice %0 {offsets = [1, 0], sizes = [1, 128], strides = [1, 1]} : vector<2x128xf32> to vector<1x128xf32>
    %9 = vector.broadcast %7 : vector<16x1xf32> to vector<16x128xf32>
    %10 = vector.broadcast %8 : vector<1x128xf32> to vector<16x128xf32>
    %11 = arith.mulf %9, %10 : vector<16x128xf32>
    %12 = arith.addf %6, %11 : vector<16x128xf32>
    %c0_3 = arith.constant 0 : index
    %c0_4 = arith.constant 0 : index
    %13 = vector.load %arg3[%c0_3, %c0_4] : memref<16x1xf32, #tpu.memory_space<vmem>>, vector<16x1xf32>
    %14 = vector.broadcast %13 : vector<16x1xf32> to vector<16x128xf32>
    %15 = arith.addf %12, %14 : vector<16x128xf32>
    %cst = arith.constant 0.000000e+00 : f32
    %16 = vector.broadcast %cst : f32 to vector<16x128xf32>
    %17 = arith.maximumf %15, %16 : vector<16x128xf32>
    %c0_5 = arith.constant 0 : index
    %c0_6 = arith.constant 0 : index
    %18 = vector.load %arg4[%c0_5, %c0_6] : memref<8x16xf32, #tpu.memory_space<vmem>>, vector<8x16xf32>
    %cst_7 = arith.constant dense<0.000000e+00> : vector<8x128xf32>
    %19 = tpu.matmul %18, %17, %cst_7 {dimension_numbers = #tpu.dot_dimension_numbers<[1], [0], [0], [1], [0, 0, 1, 1], [], []>} : vector<8x16xf32>, vector<16x128xf32>, vector<8x128xf32> -> vector<8x128xf32>
    %c0_8 = arith.constant 0 : index
    %c0_9 = arith.constant 0 : index
    %20 = vector.load %arg5[%c0_8, %c0_9] : memref<8x1xf32, #tpu.memory_space<vmem>>, vector<8x1xf32>
    %21 = vector.broadcast %20 : vector<8x1xf32> to vector<8x128xf32>
    %22 = arith.addf %19, %21 : vector<8x128xf32>
    %cst_10 = arith.constant 0.000000e+00 : f32
    %23 = vector.broadcast %cst_10 : f32 to vector<8x128xf32>
    %24 = arith.maximumf %22, %23 : vector<8x128xf32>
    %c0_11 = arith.constant 0 : index
    %c0_12 = arith.constant 0 : index
    %25 = vector.load %arg6[%c0_11, %c0_12] : memref<8x1xf32, #tpu.memory_space<vmem>>, vector<8x1xf32>
    %26 = vector.broadcast %25 : vector<8x1xf32> to vector<8x128xf32>
    %27 = arith.mulf %26, %24 : vector<8x128xf32>
    %cst_13 = arith.constant dense<0.000000e+00> : vector<128xf32>
    %28 = vector.multi_reduction <add>, %27, %cst_13 [0] : vector<8x128xf32> to vector<128xf32>
    %29 = vector.shape_cast %28 : vector<128xf32> to vector<1x128xf32>
    %c0_14 = arith.constant 0 : index
    %c0_15 = arith.constant 0 : index
    %30 = vector.load %arg7[%c0_14, %c0_15] : memref<1x1xf32, #tpu.memory_space<vmem>>, vector<1x1xf32>
    %31 = vector.broadcast %30 : vector<1x1xf32> to vector<1x128xf32>
    %32 = arith.addf %29, %31 : vector<1x128xf32>
    %c0_16 = arith.constant 0 : index
    %c0_17 = arith.constant 0 : index
    %33 = vector.load %arg8[%c0_16, %c0_17] : memref<1x128xf32, #tpu.memory_space<vmem>>, vector<1x128xf32>
    tpu.vector_store %arg8[%c0_16, %c0_17], %32 {strides = array<i32>} : memref<1x128xf32, #tpu.memory_space<vmem>>, vector<1x128xf32>,
    return
  }
  func.func @transform_0(%arg0: i32) -> (i32, i32) {
    %c0_i32 = arith.constant 0 : i32
    %c0_i32_0 = arith.constant 0 : i32
    return %c0_i32, %arg0 : i32, i32
  }
  func.func @transform_1(%arg0: i32) -> (i32, i32) {
    %c0_i32 = arith.constant 0 : i32
    %c0_i32_0 = arith.constant 0 : i32
    %c0_i32_1 = arith.constant 0 : i32
    return %c0_i32, %c0_i32_0 : i32, i32
  }
  func.func @transform_2(%arg0: i32) -> (i32, i32) {
    %c0_i32 = arith.constant 0 : i32
    %c0_i32_0 = arith.constant 0 : i32
    %c0_i32_1 = arith.constant 0 : i32
    return %c0_i32, %c0_i32_0 : i32, i32
  }
  func.func @transform_3(%arg0: i32) -> (i32, i32) {
    %c0_i32 = arith.constant 0 : i32
    %c0_i32_0 = arith.constant 0 : i32
    %c0_i32_1 = arith.constant 0 : i32
    return %c0_i32, %c0_i32_0 : i32, i32
  }
  func.func @transform_4(%arg0: i32) -> (i32, i32) {
    %c0_i32 = arith.constant 0 : i32
    %c0_i32_0 = arith.constant 0 : i32
    %c0_i32_1 = arith.constant 0 : i32
    return %c0_i32, %c0_i32_0 : i32, i32
  }
  func.func @transform_5(%arg0: i32) -> (i32, i32) {
    %c0_i32 = arith.constant 0 : i32
    %c0_i32_0 = arith.constant 0 : i32
    %c0_i32_1 = arith.constant 0 : i32
    return %c0_i32, %c0_i32_0 : i32, i32
  }
  func.func @transform_6(%arg0: i32) -> (i32, i32) {
    %c0_i32 = arith.constant 0 : i32
    %c0_i32_0 = arith.constant 0 : i32
    %c0_i32_1 = arith.constant 0 : i32
    return %c0_i32, %c0_i32_0 : i32, i32
  }
  func.func @transform_7(%arg0: i32) -> (i32, i32) {
    %c0_i32 = arith.constant 0 : i32
    %c0_i32_0 = arith.constant 0 : i32
    return %c0_i32, %arg0 : i32, i32
  }
}

</mosaic_0001>

<llo_original>
// kernel: tpu_custom_call.1
$region0: #{tpu_custom_call.1}
  #allocation0 [shape = 'u32[]', space=smem, size = 0x4, offset = 0x4, fixed_abs, tag = 'smem constant byte address 0x4 - core index']
  #allocation1 [shape = 'u32[144,128]{1,0:T(1,128)}', space=vmem, size = 0x12000, scoped, tag = 'internal scratch']
  #allocation2 [shape = 'f32[1,1]{1,0:T(1,128)S(1)}', space=vmem, size = 0x200, scoped, tag = 'scoped memory for tpu_custom_call.1']
  %s0 = inlined_call_operand.vmem [shape: f32[2,128], index: 0, kind: input, shape index: {}]
  %s1 = inlined_call_operand.vmem [shape: f32[16,2], index: 1, kind: input, shape index: {}]
  %s2 = inlined_call_operand.vmem [shape: f32[16,1], index: 2, kind: input, shape index: {}]
  %s3 = inlined_call_operand.vmem [shape: f32[8,16], index: 3, kind: input, shape index: {}]
  %s4 = inlined_call_operand.vmem [shape: f32[8,1], index: 4, kind: input, shape index: {}]
  %s5 = inlined_call_operand.vmem [shape: f32[8,1], index: 5, kind: input, shape index: {}]
  %s6 = inlined_call_operand.<no memory space> [shape: f32[1,1], index: 6, kind: input, shape index: {}]
  %s7 = inlined_call_operand.hbm [shape: f32[1,128], index: 7, kind: output, shape index: {}]
  %s8 = sld [smem:[#allocation0]]
  $region38: #{tpu_custom_call.1} parent=0
    _
  %s10 = ssub.s32 1, %s8
  %s11 = scalar_select 0, %s10, %s8
  %v12 = vstv %s6
  %13 = vst [vmem:[#allocation2] sm:$0x1] %v12
  $region1: #{tpu_custom_call.1} parent=0
    #allocation3 [shape = 'u8[512]{0}', space=vmem, size = 0x400, scoped, tag = 'output window, operand 0, single buffered']
    #allocation4 [shape = 's32[1]{0}', space=sflag, size = 0x4, scoped, tag = 'scoped memory for tpu_custom_call.1']
    %14 = vsyncpa [#allocation4], 0
    // Predicated region
    $region2: #{tpu_custom_call.1} parent=1 // pred_check
      _
    $region3: #{tpu_custom_call.1} parent=1 // pred_check_branch
      %16 = sbr.rel (0) target = $region5
    $region4: #{tpu_custom_call.1} parent=1 // pred_region
      _
    $region5: #{tpu_custom_call.1} parent=1 // pred_fallthru
      _
    // Predicated region
    $region6: #{tpu_custom_call.1} parent=1 // pred_check
      _
    $region7: #{tpu_custom_call.1} parent=1 // pred_check_branch
      %18 = sbr.rel (0) target = $region9
    $region8: #{tpu_custom_call.1} parent=1 // pred_region
      _
    $region9: #{tpu_custom_call.1} parent=1 // pred_fallthru
      _
    // Predicated region
    $region10: #{tpu_custom_call.1} parent=1 // pred_check
      _
    $region11: #{tpu_custom_call.1} parent=1 // pred_check_branch
      %20 = sbr.rel (0) target = $region13
    $region12: #{tpu_custom_call.1} parent=1 // pred_region
      _
    $region13: #{tpu_custom_call.1} parent=1 // pred_fallthru
      _
    // Predicated region
    $region14: #{tpu_custom_call.1} parent=1 // pred_check
      _
    $region15: #{tpu_custom_call.1} parent=1 // pred_check_branch
      %22 = sbr.rel (0) target = $region17
    $region16: #{tpu_custom_call.1} parent=1 // pred_region
      _
    $region17: #{tpu_custom_call.1} parent=1 // pred_fallthru
      _
    // Predicated region
    $region18: #{tpu_custom_call.1} parent=1 // pred_check
      _
    $region19: #{tpu_custom_call.1} parent=1 // pred_check_branch
      %24 = sbr.rel (0) target = $region21
    $region20: #{tpu_custom_call.1} parent=1 // pred_region
      _
    $region21: #{tpu_custom_call.1} parent=1 // pred_fallthru
      _
    // Predicated region
    $region22: #{tpu_custom_call.1} parent=1 // pred_check
      _
    $region23: #{tpu_custom_call.1} parent=1 // pred_check_branch
      %26 = sbr.rel (0) target = $region25
    $region24: #{tpu_custom_call.1} parent=1 // pred_region
      _
    $region25: #{tpu_custom_call.1} parent=1 // pred_fallthru
      _
    // Predicated region
    $region26: #{tpu_custom_call.1} parent=1 // pred_check
      _
    $region27: #{tpu_custom_call.1} parent=1 // pred_check_branch
      %28 = sbr.rel (0) target = $region29
    $region28: #{tpu_custom_call.1} parent=1 // pred_region
      _
    $region29: #{tpu_custom_call.1} parent=1 // pred_fallthru
      _
    %v29 = vld [vmem:[%s0] sm:$0x3]
    %v30 = vld [vmem:[%s1] sm:$0xff]
    %v31 = vld [vmem:[%s1 + $0x8] sm:$0xff]
    %33 = vset.pattern.permute.xlu0 0
    %34 = vperm.xlu0 %33, %v30
    %v35 = vpop.permute.xlu0 %34
    %38 = vset.pattern.permute.xlu0 0
    %39 = vperm.xlu0 %38, %v31
    %v40 = vpop.permute.xlu0 %39
    %v42 = vlaneseq
    %v43 = vshrl.u32 %v42, 7
    %v44 = vsub.s32 0, %v43
    %v45 = vrot.slane %v29, %v44
    %v46 = vmul.f32 %v35, %v45
    %v47 = vmul.f32 %v40, %v45
    %48 = vset.pattern.permute.xlu0 1
    %49 = vperm.xlu0 %48, %v30
    %v50 = vpop.permute.xlu0 %49
    %52 = vset.pattern.permute.xlu0 1
    %53 = vperm.xlu0 %52, %v31
    %v54 = vpop.permute.xlu0 %53
    %v56 = vlaneseq
    %v57 = vshrl.u32 %v56, 7
    %v58 = vsub.s32 1, %v57
    %v59 = vrot.slane %v29, %v58
    %v60 = vmul.f32 %v50, %v59
    %v61 = vmul.f32 %v54, %v59
    %v62 = vadd.f32 %v46, %v60
    %v63 = vadd.f32 %v47, %v61
    %v64 = vld [vmem:[%s2] sm:$0xff]
    %v65 = vld [vmem:[%s2 + $0x8] sm:$0xff]
    %67 = vset.pattern.permute.xlu0 0
    %68 = vperm.xlu0 %67, %v64
    %v69 = vpop.permute.xlu0 %68
    %72 = vset.pattern.permute.xlu0 0
    %73 = vperm.xlu0 %72, %v65
    %v74 = vpop.permute.xlu0 %73
    %v76 = vadd.f32 %v62, %v69
    %v77 = vadd.f32 %v63, %v74
    %v78 = vmax.f32 %v76, 0.0
    %v79 = vmax.f32 %v77, 0.0
    %v80 = vld [vmem:[%s3] sm:$0xff]
    %v81 = vld [vmem:[%s4] sm:$0xff]
    %83 = vset.pattern.permute.xlu0 0
    %84 = vperm.xlu0 %83, %v81
    %v85 = vpop.permute.xlu0 %84
    %vm87 = vcmask 130048
    %v89 = vsel %vm87, %v80, 0
    %91 = vmatprep.subr.mxu0 0.0
    %92 = vmatpush1.msra.mxu0 %v78
    %93 = vmatprep.subr.mxu0 0.0
    %94 = vmatpush1.msra.mxu0 %v79
    %95 = vmatprep.subr.mxu0 0.0
    %96 = vmatpush1.msra.mxu0 0.0
    %97 = vmatprep.subr.mxu0 0.0
    %98 = vmatpush1.msra.mxu0 0.0
    %99 = vmatprep.subr.mxu0 0.0
    %100 = vmatpush1.msra.mxu0 0.0
    %101 = vmatprep.subr.mxu0 0.0
    %102 = vmatpush1.msra.mxu0 0.0
    %103 = vmatprep.subr.mxu0 0.0
    %104 = vmatpush1.msra.mxu0 0.0
    %105 = vmatprep.subr.mxu0 0.0
    %106 = vmatpush1.msra.mxu0 0.0
    %107 = vmatprep.subr.mxu0 0.0
    %108 = vmatpush1.msra.mxu0 0.0
    %109 = vmatprep.subr.mxu0 0.0
    %110 = vmatpush1.msra.mxu0 0.0
    %111 = vmatprep.subr.mxu0 0.0
    %112 = vmatpush1.msra.mxu0 0.0
    %113 = vmatprep.subr.mxu0 0.0
    %114 = vmatpush1.msra.mxu0 0.0
    %115 = vmatprep.subr.mxu0 0.0
    %116 = vmatpush1.msra.mxu0 0.0
    %117 = vmatprep.subr.mxu0 0.0
    %118 = vmatpush1.msra.mxu0 0.0
    %119 = vmatprep.subr.mxu0 0.0
    %120 = vmatpush1.msra.mxu0 0.0
    %121 = vmatprep.subr.mxu0 0.0
    %122 = vmatpush1.msra.mxu0 0.0
    %123 = vmatprep.subr.mxu0 0.0
    %124 = vmatpush1.msra.mxu0 0.0
    %125 = vmatprep.subr.mxu0 0.0
    %126 = vmatpush1.msra.mxu0 0.0
    %127 = vmatprep.subr.mxu0 0.0
    %128 = vmatpush1.msra.mxu0 0.0
    %129 = vmatprep.subr.mxu0 0.0
    %130 = vmatpush1.msra.mxu0 0.0
    %131 = vmatprep.subr.mxu0 0.0
    %132 = vmatpush1.msra.mxu0 0.0
    %133 = vmatprep.subr.mxu0 0.0
    %134 = vmatpush1.msra.mxu0 0.0
    %135 = vmatprep.subr.mxu0 0.0
    %136 = vmatpush1.msra.mxu0 0.0
    %137 = vmatprep.subr.mxu0 0.0
    %138 = vmatpush1.msra.mxu0 0.0
    %139 = vmatprep.subr.mxu0 0.0
    %140 = vmatpush1.msra.mxu0 0.0
    %141 = vmatprep.subr.mxu0 0.0
    %142 = vmatpush1.msra.mxu0 0.0
    %143 = vmatprep.subr.mxu0 0.0
    %144 = vmatpush1.msra.mxu0 0.0
    %145 = vmatprep.subr.mxu0 0.0
    %146 = vmatpush1.msra.mxu0 0.0
    %147 = vmatprep.subr.mxu0 0.0
    %148 = vmatpush1.msra.mxu0 0.0
    %149 = vmatprep.subr.mxu0 0.0
    %150 = vmatpush1.msra.mxu0 0.0
    %151 = vmatprep.subr.mxu0 0.0
    %152 = vmatpush1.msra.mxu0 0.0
    %153 = vmatprep.subr.mxu0 0.0
    %154 = vmatpush1.msra.mxu0 0.0
    %155 = vmatprep.mubr.f32.mxu0 0.0
    %156 = vmatmul.mubr.f32.gmra.mrb[0].mxu0 %v89
    %v157 = vpop.f32.mrb[0].mxu0
    %v158 = vadd.f32 %v85, %v157
    %v159 = vpop.f32.mrb[0].mxu0
    %160 = vdwg.mxu0
    %v161 = vmax.f32 %v158, 0.0
    %v162 = vld [vmem:[%s5] sm:$0xff]
    %164 = vset.pattern.permute.xlu0 0
    %165 = vperm.xlu0 %164, %v162
    %v166 = vpop.permute.xlu0 %165
    %v168 = vmul.f32 %v166, %v161
    %v169 = vrot.slane %v168, 4
    %v170 = vadd.f32 %v168, %v169
    %v171 = vrot.slane %v170, 2
    %v172 = vadd.f32 %v170, %v171
    %v173 = vrot.slane %v172, 1
    %v174 = vadd.f32 %v172, %v173
    %v175 = vld [vmem:[#allocation2] sm:$0x1]
    %177 = vset.pattern.permute.xlu0 0
    %178 = vperm.xlu0 %177, %v175
    %v179 = vpop.permute.xlu0 %178
    %v181 = vlaneseq
    %v182 = vshrl.u32 %v181, 7
    %v183 = vsub.s32 0, %v182
    %v184 = vrot.slane %v179, %v183
    %v185 = vadd.f32 %v174, %v184
    %186 = vst [vmem:[#allocation3] sm:$0x1] %v185
    // Predicated region
    $region30: #{tpu_custom_call.1} parent=1 // pred_check
      _
    $region31: #{tpu_custom_call.1} parent=1 // pred_check_branch
      %188 = sbr.rel (0) target = $region33
    $region32: #{tpu_custom_call.1} parent=1 // pred_region
      %s190 = ssub.s32 16, 16
      %191 = vsyncadd [#allocation4], %s190
      %s193 = sshll.u32 [#allocation3], 4
      %s194 = int_to_ptr.vmem [resolvable:$true] %s193
      %196 = dma.vmem_to_hbm [thread:$0]  %s194, 16, %s7, [#allocation4]
    $region33: #{tpu_custom_call.1} parent=1 // pred_fallthru
      _
    // Predicated region
    $region34: #{tpu_custom_call.1} parent=1 // pred_check
      _
    $region35: #{tpu_custom_call.1} parent=1 // pred_check_branch
      %198 = sbr.rel (0) target = $region37
    $region36: #{tpu_custom_call.1} parent=1 // pred_region
      %199 = dma.done [#allocation4], 16
    $region37: #{tpu_custom_call.1} parent=1 // pred_fallthru
      _
    %200 = vsyncpa [#allocation4], 1

</llo_original>
